<compile_context>
chip_gen: v6e
topology: v6e:2x2x1
jax: 0.10.0
libtpu: 0.0.40
codegen_flags: <defaults>
</compile_context>

<pallas_src>
import functools

import jax
import jax.numpy as jnp
from jax.experimental import pallas as pl
from jax.experimental.pallas import tpu as pltpu

NUM_HIDDEN_LAYERS = 4
BN_EPS = 1e-5


def _actor_kernel(x_ref, w_ref, v_ref, o_ref, *,
                  input_size, hidden_size, output_size,
                  num_hidden_layers, apply_bn):
    """Whole Actor forward in VMEM.

    x_ref : [B, IN]                         f32 activations
    w_ref : [IN + (L+1)*H, H]               bf16 packed weights:
              rows [0, IN)                     w_in            [IN, H]
              rows [IN + l*H, IN + (l+1)*H)    w_hidden[l]     [H, H]
              rows [IN + L*H, IN + (L+1)*H)    w_out (cols >= OUT are zero)
    v_ref : [2 + 3*L, H]                    f32 packed vectors:
              row 0            b_in
              rows 1   .. L    b_hidden[l]
              rows 1+L .. 2L   gamma[l]
              rows 1+2L.. 3L   beta[l]
              row 1+3L         b_out (lanes >= OUT are zero)
    o_ref : [B, OUT]
    """
    IN, H, OUT, L = input_size, hidden_size, output_size, num_hidden_layers
    R_B_IN = 0
    R_B_H = 1
    R_GAMMA = 1 + L
    R_BETA = 1 + 2 * L
    R_B_OUT = 1 + 3 * L

    # input_layer + ReLU  (bf16 MXU matmul, f32 accumulate)
    x = x_ref[...].astype(jnp.bfloat16)
    h = jnp.dot(x, w_ref[0:IN, :], preferred_element_type=jnp.float32)
    h = jnp.maximum(h + v_ref[R_B_IN:R_B_IN + 1, :], 0.0)

    # hidden Linear -> BatchNorm1d (batch stats, if B > 1) -> ReLU
    for l in range(L):
        row0 = IN + l * H
        z = jnp.dot(h.astype(jnp.bfloat16), w_ref[row0:row0 + H, :],
                    preferred_element_type=jnp.float32)
        z = z + v_ref[R_B_H + l:R_B_H + l + 1, :]
        if apply_bn:  # static: batch size known at trace time
            mean = jnp.mean(z, axis=0, keepdims=True)
            var = jnp.mean((z - mean) * (z - mean), axis=0, keepdims=True)
            # Fused affine: scale = gamma * rsqrt(var+eps); shift = beta - mean*scale
            scale = v_ref[R_GAMMA + l:R_GAMMA + l + 1, :] * jax.lax.rsqrt(var + BN_EPS)
            shift = v_ref[R_BETA + l:R_BETA + l + 1, :] - mean * scale
            z = z * scale + shift
        h = jnp.maximum(z, 0.0)

    # output_layer (no activation); w_out block is column-padded to H with zeros
    row0 = IN + L * H
    out = jnp.dot(h.astype(jnp.bfloat16), w_ref[row0:row0 + H, :],
                  preferred_element_type=jnp.float32)
    b_out = v_ref[R_B_OUT:R_B_OUT + 1, :][:, :OUT]
    o_ref[...] = out[:, :OUT] + b_out


def actor_forward(state, w_pack, v_pack, *,
                  input_size, hidden_size, output_size,
                  num_hidden_layers=NUM_HIDDEN_LAYERS):
    """Pallas wrapper. state: [B, IN] float32; slabs from pack_actor_params."""
    B = state.shape[0]
    apply_bn = B > 1  # mirrors `if x.size(0) > 1:` in the PyTorch forward

    kernel = functools.partial(
        _actor_kernel,
        input_size=input_size, hidden_size=hidden_size, output_size=output_size,
        num_hidden_layers=num_hidden_layers, apply_bn=apply_bn,
    )

    flops = 2 * B * (input_size * hidden_size
                     + num_hidden_layers * hidden_size * hidden_size
                     + hidden_size * output_size)
    bytes_accessed = (state.size * 4 + w_pack.size * 2 + v_pack.size * 4
                      + B * output_size * 4)

    vmem_spec = pl.BlockSpec(memory_space=pltpu.VMEM)
    return pl.pallas_call(
        kernel,
        out_shape=jax.ShapeDtypeStruct((B, output_size), jnp.float32),
        in_specs=[vmem_spec, vmem_spec, vmem_spec],
        out_specs=vmem_spec,
        cost_estimate=pl.CostEstimate(
            flops=flops,
            transcendentals=num_hidden_layers * hidden_size,  # rsqrt lanes
            bytes_accessed=bytes_accessed),
    )(state, w_pack, v_pack)


def init_actor_params(key, input_size, hidden_size, output_size,
                      num_hidden_layers=NUM_HIDDEN_LAYERS):
    """Deterministic synthetic parameters (PyTorch-like uniform fan-in init)."""
    ks = jax.random.split(key, 2 + num_hidden_layers)

    def lin(k, fan_in, fan_out):
        bound = 1.0 / (fan_in ** 0.5)
        kw, kb = jax.random.split(k)
        w = jax.random.uniform(kw, (fan_in, fan_out), jnp.float32, -bound, bound)
        b = jax.random.uniform(kb, (fan_out,), jnp.float32, -bound, bound)
        return w, b

    w_in, b_in = lin(ks[0], input_size, hidden_size)
    w_h, b_h = [], []
    for l in range(num_hidden_layers):
        w, b = lin(ks[1 + l], hidden_size, hidden_size)
        w_h.append(w)
        b_h.append(b)
    w_out, b_out = lin(ks[1 + num_hidden_layers], hidden_size, output_size)

    return {
        "w_in": w_in, "b_in": b_in,
        "w_h": w_h, "b_h": b_h,
        # BatchNorm1d affine params: gamma=1, beta=0 (PyTorch default)
        "gamma": [jnp.ones((hidden_size,), jnp.float32)] * num_hidden_layers,
        "beta": [jnp.zeros((hidden_size,), jnp.float32)] * num_hidden_layers,
        "w_out": w_out, "b_out": b_out,
    }


def pack_actor_params(params, input_size, hidden_size, output_size,
                      num_hidden_layers=NUM_HIDDEN_LAYERS):
    """Pack all params into one bf16 weight slab + one f32 vector slab."""
    H, OUT, L = hidden_size, output_size, num_hidden_layers

    # Weight slab: [IN + (L+1)*H, H]  (w_out column-padded to H with zeros)
    w_out_pad = jnp.zeros((H, H), jnp.float32).at[:, :OUT].set(params["w_out"])
    w_pack = jnp.concatenate(
        [params["w_in"]] + list(params["w_h"]) + [w_out_pad],
        axis=0).astype(jnp.bfloat16)

    # Vector slab: [2 + 3L, H] f32 — one vector per row, no size-1 dims
    b_out_pad = jnp.zeros((H,), jnp.float32).at[:OUT].set(params["b_out"])
    v_rows = ([params["b_in"]]
              + list(params["b_h"])
              + list(params["gamma"])
              + list(params["beta"])
              + [b_out_pad])
    v_pack = jnp.stack(v_rows, axis=0)
    return w_pack, v_pack


def actor_forward_ref(state, w_pack, v_pack, *,
                      input_size, hidden_size, output_size,
                      num_hidden_layers=NUM_HIDDEN_LAYERS):
    """Pure-JAX reference mirroring the kernel math (incl. bf16 matmul inputs)."""
    IN, H, OUT, L = input_size, hidden_size, output_size, num_hidden_layers
    apply_bn = state.shape[0] > 1

    h = jnp.dot(state.astype(jnp.bfloat16), w_pack[0:IN],
                preferred_element_type=jnp.float32) + v_pack[0:1]
    h = jnp.maximum(h, 0.0)
    for l in range(L):
        row0 = IN + l * H
        z = jnp.dot(h.astype(jnp.bfloat16), w_pack[row0:row0 + H],
                    preferred_element_type=jnp.float32) + v_pack[1 + l:2 + l]
        if apply_bn:
            mean = jnp.mean(z, axis=0, keepdims=True)
            var = jnp.mean((z - mean) ** 2, axis=0, keepdims=True)
            z = (z - mean) / jnp.sqrt(var + BN_EPS)
            z = z * v_pack[1 + L + l:2 + L + l] + v_pack[1 + 2 * L + l:2 + 2 * L + l]
        h = jnp.maximum(z, 0.0)
    row0 = IN + L * H
    out = jnp.dot(h.astype(jnp.bfloat16), w_pack[row0:row0 + H],
                  preferred_element_type=jnp.float32)
    return out[:, :OUT] + v_pack[1 + 3 * L:2 + 3 * L, :OUT]


if __name__ == "__main__":
    key = jax.random.PRNGKey(0)
    k_params, k_state = jax.random.split(key)

    batch = 8
    input_size = 32
    hidden_size = 64
    output_size = 16

    params = init_actor_params(k_params, input_size, hidden_size, output_size)
    w_pack, v_pack = pack_actor_params(params, input_size, hidden_size, output_size)
    state = jax.random.normal(k_state, (batch, input_size), jnp.float32)

    out = actor_forward(state, w_pack, v_pack,
                        input_size=input_size, hidden_size=hidden_size,
                        output_size=output_size)
    out = jax.block_until_ready(out)

    ref = actor_forward_ref(state, w_pack, v_pack,
                            input_size=input_size, hidden_size=hidden_size,
                            output_size=output_size)
    assert out.shape == (batch, output_size)
    assert jnp.allclose(out, ref, atol=1e-3, rtol=1e-3), "mismatch vs reference"

    print("KERNEL_OK")
</pallas_src>

<mosaic_0001>
module attributes {stable_mosaic.version = 11 : i64} {
  func.func @_actor_kernel(%arg0: memref<8x32xf32, #tpu.memory_space<vmem>>, %arg1: memref<352x64xbf16, #tpu.memory_space<vmem>>, %arg2: memref<14x64xf32, #tpu.memory_space<vmem>>, %arg3: memref<8x16xf32, #tpu.memory_space<vmem>>) attributes {dimension_semantics = [], scalar_prefetch = 0 : i64, scratch_operands = 0 : i64, tpu.core_type = #tpu.core_type<tc>} {
    %c0 = arith.constant 0 : index
    %c0_0 = arith.constant 0 : index
    %0 = vector.load %arg0[%c0, %c0_0] : memref<8x32xf32, #tpu.memory_space<vmem>>, vector<8x32xf32>
    %1 = arith.truncf %0 : vector<8x32xf32> to vector<8x32xbf16>
    %c0_1 = arith.constant 0 : index
    %c0_2 = arith.constant 0 : index
    %2 = vector.load %arg1[%c0_1, %c0_2] : memref<352x64xbf16, #tpu.memory_space<vmem>>, vector<32x64xbf16>
    %cst = arith.constant dense<0.000000e+00> : vector<8x64xf32>
    %3 = tpu.matmul %1, %2, %cst {dimension_numbers = #tpu.dot_dimension_numbers<[1], [0], [0], [1], [0, 0, 1, 1], [], []>} : vector<8x32xbf16>, vector<32x64xbf16>, vector<8x64xf32> -> vector<8x64xf32>
    %c0_3 = arith.constant 0 : index
    %c0_4 = arith.constant 0 : index
    %4 = vector.load %arg2[%c0_3, %c0_4] : memref<14x64xf32, #tpu.memory_space<vmem>>, vector<1x64xf32>
    %5 = vector.broadcast %4 : vector<1x64xf32> to vector<8x64xf32>
    %6 = arith.addf %3, %5 : vector<8x64xf32>
    %cst_5 = arith.constant 0.000000e+00 : f32
    %7 = vector.broadcast %cst_5 : f32 to vector<8x64xf32>
    %8 = arith.maximumf %6, %7 : vector<8x64xf32>
    %9 = arith.truncf %8 : vector<8x64xf32> to vector<8x64xbf16>
    %c32 = arith.constant 32 : index
    %c0_6 = arith.constant 0 : index
    %10 = vector.load %arg1[%c32, %c0_6] : memref<352x64xbf16, #tpu.memory_space<vmem>>, vector<64x64xbf16>
    %cst_7 = arith.constant dense<0.000000e+00> : vector<8x64xf32>
    %11 = tpu.matmul %9, %10, %cst_7 {dimension_numbers = #tpu.dot_dimension_numbers<[1], [0], [0], [1], [0, 0, 1, 1], [], []>} : vector<8x64xbf16>, vector<64x64xbf16>, vector<8x64xf32> -> vector<8x64xf32>
    %c1 = arith.constant 1 : index
    %c0_8 = arith.constant 0 : index
    %12 = vector.load %arg2[%c1, %c0_8] : memref<14x64xf32, #tpu.memory_space<vmem>>, vector<1x64xf32>
    %13 = vector.broadcast %12 : vector<1x64xf32> to vector<8x64xf32>
    %14 = arith.addf %11, %13 : vector<8x64xf32>
    %cst_9 = arith.constant dense<0.000000e+00> : vector<64xf32>
    %15 = vector.multi_reduction <add>, %14, %cst_9 [0] : vector<8x64xf32> to vector<64xf32>
    %16 = vector.shape_cast %15 : vector<64xf32> to vector<1x64xf32>
    %cst_10 = arith.constant 8.000000e+00 : f32
    %17 = vector.broadcast %cst_10 : f32 to vector<1x64xf32>
    %18 = arith.divf %16, %17 : vector<1x64xf32>
    %19 = vector.broadcast %18 : vector<1x64xf32> to vector<8x64xf32>
    %20 = arith.subf %14, %19 : vector<8x64xf32>
    %21 = vector.broadcast %18 : vector<1x64xf32> to vector<8x64xf32>
    %22 = arith.subf %14, %21 : vector<8x64xf32>
    %23 = arith.mulf %20, %22 : vector<8x64xf32>
    %cst_11 = arith.constant dense<0.000000e+00> : vector<64xf32>
    %24 = vector.multi_reduction <add>, %23, %cst_11 [0] : vector<8x64xf32> to vector<64xf32>
    %25 = vector.shape_cast %24 : vector<64xf32> to vector<1x64xf32>
    %cst_12 = arith.constant 8.000000e+00 : f32
    %26 = vector.broadcast %cst_12 : f32 to vector<1x64xf32>
    %27 = arith.divf %25, %26 : vector<1x64xf32>
    %c5 = arith.constant 5 : index
    %c0_13 = arith.constant 0 : index
    %28 = vector.load %arg2[%c5, %c0_13] : memref<14x64xf32, #tpu.memory_space<vmem>>, vector<1x64xf32>
    %cst_14 = arith.constant 9.99999974E-6 : f32
    %29 = vector.broadcast %cst_14 : f32 to vector<1x64xf32>
    %30 = arith.addf %27, %29 : vector<1x64xf32>
    %31 = math.rsqrt %30 : vector<1x64xf32>
    %32 = arith.mulf %28, %31 : vector<1x64xf32>
    %c9 = arith.constant 9 : index
    %c0_15 = arith.constant 0 : index
    %33 = vector.load %arg2[%c9, %c0_15] : memref<14x64xf32, #tpu.memory_space<vmem>>, vector<1x64xf32>
    %34 = arith.mulf %18, %32 : vector<1x64xf32>
    %35 = arith.subf %33, %34 : vector<1x64xf32>
    %36 = vector.broadcast %32 : vector<1x64xf32> to vector<8x64xf32>
    %37 = arith.mulf %14, %36 : vector<8x64xf32>
    %38 = vector.broadcast %35 : vector<1x64xf32> to vector<8x64xf32>
    %39 = arith.addf %37, %38 : vector<8x64xf32>
    %cst_16 = arith.constant 0.000000e+00 : f32
    %40 = vector.broadcast %cst_16 : f32 to vector<8x64xf32>
    %41 = arith.maximumf %39, %40 : vector<8x64xf32>
    %42 = arith.truncf %41 : vector<8x64xf32> to vector<8x64xbf16>
    %c96 = arith.constant 96 : index
    %c0_17 = arith.constant 0 : index
    %43 = vector.load %arg1[%c96, %c0_17] : memref<352x64xbf16, #tpu.memory_space<vmem>>, vector<64x64xbf16>
    %cst_18 = arith.constant dense<0.000000e+00> : vector<8x64xf32>
    %44 = tpu.matmul %42, %43, %cst_18 {dimension_numbers = #tpu.dot_dimension_numbers<[1], [0], [0], [1], [0, 0, 1, 1], [], []>} : vector<8x64xbf16>, vector<64x64xbf16>, vector<8x64xf32> -> vector<8x64xf32>
    %c2 = arith.constant 2 : index
    %c0_19 = arith.constant 0 : index
    %45 = vector.load %arg2[%c2, %c0_19] : memref<14x64xf32, #tpu.memory_space<vmem>>, vector<1x64xf32>
    %46 = vector.broadcast %45 : vector<1x64xf32> to vector<8x64xf32>
    %47 = arith.addf %44, %46 : vector<8x64xf32>
    %cst_20 = arith.constant dense<0.000000e+00> : vector<64xf32>
    %48 = vector.multi_reduction <add>, %47, %cst_20 [0] : vector<8x64xf32> to vector<64xf32>
    %49 = vector.shape_cast %48 : vector<64xf32> to vector<1x64xf32>
    %cst_21 = arith.constant 8.000000e+00 : f32
    %50 = vector.broadcast %cst_21 : f32 to vector<1x64xf32>
    %51 = arith.divf %49, %50 : vector<1x64xf32>
    %52 = vector.broadcast %51 : vector<1x64xf32> to vector<8x64xf32>
    %53 = arith.subf %47, %52 : vector<8x64xf32>
    %54 = vector.broadcast %51 : vector<1x64xf32> to vector<8x64xf32>
    %55 = arith.subf %47, %54 : vector<8x64xf32>
    %56 = arith.mulf %53, %55 : vector<8x64xf32>
    %cst_22 = arith.constant dense<0.000000e+00> : vector<64xf32>
    %57 = vector.multi_reduction <add>, %56, %cst_22 [0] : vector<8x64xf32> to vector<64xf32>
    %58 = vector.shape_cast %57 : vector<64xf32> to vector<1x64xf32>
    %cst_23 = arith.constant 8.000000e+00 : f32
    %59 = vector.broadcast %cst_23 : f32 to vector<1x64xf32>
    %60 = arith.divf %58, %59 : vector<1x64xf32>
    %c6 = arith.constant 6 : index
    %c0_24 = arith.constant 0 : index
    %61 = vector.load %arg2[%c6, %c0_24] : memref<14x64xf32, #tpu.memory_space<vmem>>, vector<1x64xf32>
    %cst_25 = arith.constant 9.99999974E-6 : f32
    %62 = vector.broadcast %cst_25 : f32 to vector<1x64xf32>
    %63 = arith.addf %60, %62 : vector<1x64xf32>
    %64 = math.rsqrt %63 : vector<1x64xf32>
    %65 = arith.mulf %61, %64 : vector<1x64xf32>
    %c10 = arith.constant 10 : index
    %c0_26 = arith.constant 0 : index
    %66 = vector.load %arg2[%c10, %c0_26] : memref<14x64xf32, #tpu.memory_space<vmem>>, vector<1x64xf32>
    %67 = arith.mulf %51, %65 : vector<1x64xf32>
    %68 = arith.subf %66, %67 : vector<1x64xf32>
    %69 = vector.broadcast %65 : vector<1x64xf32> to vector<8x64xf32>
    %70 = arith.mulf %47, %69 : vector<8x64xf32>
    %71 = vector.broadcast %68 : vector<1x64xf32> to vector<8x64xf32>
    %72 = arith.addf %70, %71 : vector<8x64xf32>
    %cst_27 = arith.constant 0.000000e+00 : f32
    %73 = vector.broadcast %cst_27 : f32 to vector<8x64xf32>
    %74 = arith.maximumf %72, %73 : vector<8x64xf32>
    %75 = arith.truncf %74 : vector<8x64xf32> to vector<8x64xbf16>
    %c160 = arith.constant 160 : index
    %c0_28 = arith.constant 0 : index
    %76 = vector.load %arg1[%c160, %c0_28] : memref<352x64xbf16, #tpu.memory_space<vmem>>, vector<64x64xbf16>
    %cst_29 = arith.constant dense<0.000000e+00> : vector<8x64xf32>
    %77 = tpu.matmul %75, %76, %cst_29 {dimension_numbers = #tpu.dot_dimension_numbers<[1], [0], [0], [1], [0, 0, 1, 1], [], []>} : vector<8x64xbf16>, vector<64x64xbf16>, vector<8x64xf32> -> vector<8x64xf32>
    %c3 = arith.constant 3 : index
    %c0_30 = arith.constant 0 : index
    %78 = vector.load %arg2[%c3, %c0_30] : memref<14x64xf32, #tpu.memory_space<vmem>>, vector<1x64xf32>
    %79 = vector.broadcast %78 : vector<1x64xf32> to vector<8x64xf32>
    %80 = arith.addf %77, %79 : vector<8x64xf32>
    %cst_31 = arith.constant dense<0.000000e+00> : vector<64xf32>
    %81 = vector.multi_reduction <add>, %80, %cst_31 [0] : vector<8x64xf32> to vector<64xf32>
    %82 = vector.shape_cast %81 : vector<64xf32> to vector<1x64xf32>
    %cst_32 = arith.constant 8.000000e+00 : f32
    %83 = vector.broadcast %cst_32 : f32 to vector<1x64xf32>
    %84 = arith.divf %82, %83 : vector<1x64xf32>
    %85 = vector.broadcast %84 : vector<1x64xf32> to vector<8x64xf32>
    %86 = arith.subf %80, %85 : vector<8x64xf32>
    %87 = vector.broadcast %84 : vector<1x64xf32> to vector<8x64xf32>
    %88 = arith.subf %80, %87 : vector<8x64xf32>
    %89 = arith.mulf %86, %88 : vector<8x64xf32>
    %cst_33 = arith.constant dense<0.000000e+00> : vector<64xf32>
    %90 = vector.multi_reduction <add>, %89, %cst_33 [0] : vector<8x64xf32> to vector<64xf32>
    %91 = vector.shape_cast %90 : vector<64xf32> to vector<1x64xf32>
    %cst_34 = arith.constant 8.000000e+00 : f32
    %92 = vector.broadcast %cst_34 : f32 to vector<1x64xf32>
    %93 = arith.divf %91, %92 : vector<1x64xf32>
    %c7 = arith.constant 7 : index
    %c0_35 = arith.constant 0 : index
    %94 = vector.load %arg2[%c7, %c0_35] : memref<14x64xf32, #tpu.memory_space<vmem>>, vector<1x64xf32>
    %cst_36 = arith.constant 9.99999974E-6 : f32
    %95 = vector.broadcast %cst_36 : f32 to vector<1x64xf32>
    %96 = arith.addf %93, %95 : vector<1x64xf32>
    %97 = math.rsqrt %96 : vector<1x64xf32>
    %98 = arith.mulf %94, %97 : vector<1x64xf32>
    %c11 = arith.constant 11 : index
    %c0_37 = arith.constant 0 : index
    %99 = vector.load %arg2[%c11, %c0_37] : memref<14x64xf32, #tpu.memory_space<vmem>>, vector<1x64xf32>
    %100 = arith.mulf %84, %98 : vector<1x64xf32>
    %101 = arith.subf %99, %100 : vector<1x64xf32>
    %102 = vector.broadcast %98 : vector<1x64xf32> to vector<8x64xf32>
    %103 = arith.mulf %80, %102 : vector<8x64xf32>
    %104 = vector.broadcast %101 : vector<1x64xf32> to vector<8x64xf32>
    %105 = arith.addf %103, %104 : vector<8x64xf32>
    %cst_38 = arith.constant 0.000000e+00 : f32
    %106 = vector.broadcast %cst_38 : f32 to vector<8x64xf32>
    %107 = arith.maximumf %105, %106 : vector<8x64xf32>
    %108 = arith.truncf %107 : vector<8x64xf32> to vector<8x64xbf16>
    %c224 = arith.constant 224 : index
    %c0_39 = arith.constant 0 : index
    %109 = vector.load %arg1[%c224, %c0_39] : memref<352x64xbf16, #tpu.memory_space<vmem>>, vector<64x64xbf16>
    %cst_40 = arith.constant dense<0.000000e+00> : vector<8x64xf32>
    %110 = tpu.matmul %108, %109, %cst_40 {dimension_numbers = #tpu.dot_dimension_numbers<[1], [0], [0], [1], [0, 0, 1, 1], [], []>} : vector<8x64xbf16>, vector<64x64xbf16>, vector<8x64xf32> -> vector<8x64xf32>
    %c4 = arith.constant 4 : index
    %c0_41 = arith.constant 0 : index
    %111 = vector.load %arg2[%c4, %c0_41] : memref<14x64xf32, #tpu.memory_space<vmem>>, vector<1x64xf32>
    %112 = vector.broadcast %111 : vector<1x64xf32> to vector<8x64xf32>
    %113 = arith.addf %110, %112 : vector<8x64xf32>
    %cst_42 = arith.constant dense<0.000000e+00> : vector<64xf32>
    %114 = vector.multi_reduction <add>, %113, %cst_42 [0] : vector<8x64xf32> to vector<64xf32>
    %115 = vector.shape_cast %114 : vector<64xf32> to vector<1x64xf32>
    %cst_43 = arith.constant 8.000000e+00 : f32
    %116 = vector.broadcast %cst_43 : f32 to vector<1x64xf32>
    %117 = arith.divf %115, %116 : vector<1x64xf32>
    %118 = vector.broadcast %117 : vector<1x64xf32> to vector<8x64xf32>
    %119 = arith.subf %113, %118 : vector<8x64xf32>
    %120 = vector.broadcast %117 : vector<1x64xf32> to vector<8x64xf32>
    %121 = arith.subf %113, %120 : vector<8x64xf32>
    %122 = arith.mulf %119, %121 : vector<8x64xf32>
    %cst_44 = arith.constant dense<0.000000e+00> : vector<64xf32>
    %123 = vector.multi_reduction <add>, %122, %cst_44 [0] : vector<8x64xf32> to vector<64xf32>
    %124 = vector.shape_cast %123 : vector<64xf32> to vector<1x64xf32>
    %cst_45 = arith.constant 8.000000e+00 : f32
    %125 = vector.broadcast %cst_45 : f32 to vector<1x64xf32>
    %126 = arith.divf %124, %125 : vector<1x64xf32>
    %c8 = arith.constant 8 : index
    %c0_46 = arith.constant 0 : index
    %127 = vector.load %arg2[%c8, %c0_46] : memref<14x64xf32, #tpu.memory_space<vmem>>, vector<1x64xf32>
    %cst_47 = arith.constant 9.99999974E-6 : f32
    %128 = vector.broadcast %cst_47 : f32 to vector<1x64xf32>
    %129 = arith.addf %126, %128 : vector<1x64xf32>
    %130 = math.rsqrt %129 : vector<1x64xf32>
    %131 = arith.mulf %127, %130 : vector<1x64xf32>
    %c12 = arith.constant 12 : index
    %c0_48 = arith.constant 0 : index
    %132 = vector.load %arg2[%c12, %c0_48] : memref<14x64xf32, #tpu.memory_space<vmem>>, vector<1x64xf32>
    %133 = arith.mulf %117, %131 : vector<1x64xf32>
    %134 = arith.subf %132, %133 : vector<1x64xf32>
    %135 = vector.broadcast %131 : vector<1x64xf32> to vector<8x64xf32>
    %136 = arith.mulf %113, %135 : vector<8x64xf32>
    %137 = vector.broadcast %134 : vector<1x64xf32> to vector<8x64xf32>
    %138 = arith.addf %136, %137 : vector<8x64xf32>
    %cst_49 = arith.constant 0.000000e+00 : f32
    %139 = vector.broadcast %cst_49 : f32 to vector<8x64xf32>
    %140 = arith.maximumf %138, %139 : vector<8x64xf32>
    %141 = arith.truncf %140 : vector<8x64xf32> to vector<8x64xbf16>
    %c288 = arith.constant 288 : index
    %c0_50 = arith.constant 0 : index
    %142 = vector.load %arg1[%c288, %c0_50] : memref<352x64xbf16, #tpu.memory_space<vmem>>, vector<64x64xbf16>
    %cst_51 = arith.constant dense<0.000000e+00> : vector<8x64xf32>
    %143 = tpu.matmul %141, %142, %cst_51 {dimension_numbers = #tpu.dot_dimension_numbers<[1], [0], [0], [1], [0, 0, 1, 1], [], []>} : vector<8x64xbf16>, vector<64x64xbf16>, vector<8x64xf32> -> vector<8x64xf32>
    %c13 = arith.constant 13 : index
    %c0_52 = arith.constant 0 : index
    %144 = vector.load %arg2[%c13, %c0_52] : memref<14x64xf32, #tpu.memory_space<vmem>>, vector<1x64xf32>
    %145 = vector.extract_strided_slice %144 {offsets = [0, 0], sizes = [1, 16], strides = [1, 1]} : vector<1x64xf32> to vector<1x16xf32>
    %146 = vector.extract_strided_slice %143 {offsets = [0, 0], sizes = [8, 16], strides = [1, 1]} : vector<8x64xf32> to vector<8x16xf32>
    %147 = vector.broadcast %145 : vector<1x16xf32> to vector<8x16xf32>
    %148 = arith.addf %146, %147 : vector<8x16xf32>
    %c0_53 = arith.constant 0 : index
    %c0_54 = arith.constant 0 : index
    %149 = vector.load %arg3[%c0_53, %c0_54] : memref<8x16xf32, #tpu.memory_space<vmem>>, vector<8x16xf32>
    tpu.vector_store %arg3[%c0_53, %c0_54], %148 {strides = array<i32>} : memref<8x16xf32, #tpu.memory_space<vmem>>, vector<8x16xf32>,
    return
  }
}

</mosaic_0001>

<llo_original>
// kernel: tpu_custom_call.1
$region0: #{tpu_custom_call.1}
  #allocation0 [shape = 'u32[]', space=smem, size = 0x4, offset = 0x4, fixed_abs, tag = 'smem constant byte address 0x4 - core index']
  #allocation1 [shape = 'u32[144,128]{1,0:T(1,128)}', space=vmem, size = 0x12000, scoped, tag = 'internal scratch']
  %s0 = inlined_call_operand.vmem [shape: f32[8,32], index: 0, kind: input, shape index: {}]
  %s1 = inlined_call_operand.vmem [shape: bf16[352,64], index: 1, kind: input, shape index: {}]
  %s2 = inlined_call_operand.vmem [shape: f32[14,64], index: 2, kind: input, shape index: {}]
  %s3 = inlined_call_operand.hbm [shape: f32[8,16], index: 3, kind: output, shape index: {}]
  %s4 = sld [smem:[#allocation0]]
  $region22: #{tpu_custom_call.1} parent=0
    _
  %s6 = ssub.s32 1, %s4
  %s7 = scalar_select 0, %s6, %s4
  $region1: #{tpu_custom_call.1} parent=0
    #allocation2 [shape = 'u8[4096]{0}', space=vmem, size = 0x1000, scoped, tag = 'output window, operand 0, single buffered']
    #allocation3 [shape = 's32[1]{0}', space=sflag, size = 0x4, scoped, tag = 'scoped memory for tpu_custom_call.1']
    %8 = vsyncpa [#allocation3], 0
    // Predicated region
    $region2: #{tpu_custom_call.1} parent=1 // pred_check
      _
    $region3: #{tpu_custom_call.1} parent=1 // pred_check_branch
      %10 = sbr.rel (0) target = $region5
    $region4: #{tpu_custom_call.1} parent=1 // pred_region
      _
    $region5: #{tpu_custom_call.1} parent=1 // pred_fallthru
      _
    // Predicated region
    $region6: #{tpu_custom_call.1} parent=1 // pred_check
      _
    $region7: #{tpu_custom_call.1} parent=1 // pred_check_branch
      %12 = sbr.rel (0) target = $region9
    $region8: #{tpu_custom_call.1} parent=1 // pred_region
      _
    $region9: #{tpu_custom_call.1} parent=1 // pred_fallthru
      _
    // Predicated region
    $region10: #{tpu_custom_call.1} parent=1 // pred_check
      _
    $region11: #{tpu_custom_call.1} parent=1 // pred_check_branch
      %14 = sbr.rel (0) target = $region13
    $region12: #{tpu_custom_call.1} parent=1 // pred_region
      _
    $region13: #{tpu_custom_call.1} parent=1 // pred_fallthru
      _
    %v16 = vld [vmem:[%s0] sm:$0xff]
    %v17 = vpack.c.bf16 %v16, %v16
    %v18 = vld [vmem:[%s1] sm:$0xf]
    %v19 = vld [vmem:[%s1 + $0x4] sm:$0xf]
    %v20 = vld [vmem:[%s1 + $0x8] sm:$0xf]
    %v21 = vld [vmem:[%s1 + $0xc] sm:$0xf]
    %v22 = vld [vmem:[%s2] sm:$0x1]
    %v23 = vlaneseq
    %v24 = vshrl.u32 %v23, 7
    %v25 = vsub.s32 0, %v24
    %v26 = vrot.slane %v22, %v25
    %v31 = vunpack.c.l.b16 %v18
    %v32 = vunpack.c.l.b16 %v19
    %v33 = vunpack.c.l.b16 %v20
    %v34 = vunpack.c.l.b16 %v21
    %v35 = vpack.c.b16 %v32, %v31
    %v36 = vpack.c.b16 %v34, %v33
    %vm39 = vcmask 261120
    %v41 = vsel %vm39, %v17, 0
    %43 = vmatprep.subr.bf16.mxu0 0
    %44 = vmatpush1.bf16.msra.mxu0 0
    %45 = vmatprep.subr.bf16.mxu0 0
    %46 = vmatpush1.bf16.msra.mxu0 0
    %47 = vmatprep.subr.bf16.mxu0 0
    %48 = vmatpush1.bf16.msra.mxu0 0
    %49 = vmatprep.subr.bf16.mxu0 0
    %50 = vmatpush1.bf16.msra.mxu0 0
    %51 = vmatprep.subr.bf16.mxu0 0
    %52 = vmatpush1.bf16.msra.mxu0 0
    %53 = vmatprep.subr.bf16.mxu0 0
    %54 = vmatpush1.bf16.msra.mxu0 0
    %55 = vmatprep.subr.bf16.mxu0 0
    %56 = vmatpush1.bf16.msra.mxu0 %v36
    %57 = vmatprep.subr.bf16.mxu0 0
    %58 = vmatpush1.bf16.msra.mxu0 %v35
    %59 = vmatprep.subr.bf16.mxu0 0
    %60 = vmatpush2.bf16.msra.mxu0 0
    %61 = vmatprep.subr.bf16.mxu0 0
    %62 = vmatpush2.bf16.msra.mxu0 0
    %63 = vmatprep.subr.bf16.mxu0 0
    %64 = vmatpush2.bf16.msra.mxu0 0
    %65 = vmatprep.subr.bf16.mxu0 0
    %66 = vmatpush2.bf16.msra.mxu0 0
    %67 = vmatprep.subr.bf16.mxu0 0
    %68 = vmatpush2.bf16.msra.mxu0 0
    %69 = vmatprep.subr.bf16.mxu0 0
    %70 = vmatpush2.bf16.msra.mxu0 0
    %71 = vmatprep.subr.bf16.mxu0 0
    %72 = vmatpush2.bf16.msra.mxu0 0
    %73 = vmatprep.subr.bf16.mxu0 0
    %74 = vmatpush2.bf16.msra.mxu0 0
    %75 = vmatprep.mubr.bf16.mxu0 0
    %76 = vmatmul.mubr.bf16.gmra.mxu0 %v41
    %v77 = vpop.f32.mrf.mxu0
    %v78 = vadd.f32 %v26, %v77
    %v79 = vpop.f32.mrf.mxu0
    %v80 = vpop.f32.mrf.mxu0
    %v81 = vpop.f32.mrf.mxu0
    %82 = vdwg.mxu0
    %v83 = vmax.f32 %v78, 0.0
    %v84 = vpack.c.bf16 %v83, %v83
    %v85 = vld [vmem:[%s1 + $0x10] sm:$0xf]
    %v86 = vld [vmem:[%s1 + $0x14] sm:$0xf]
    %v87 = vld [vmem:[%s1 + $0x18] sm:$0xf]
    %v88 = vld [vmem:[%s1 + $0x1c] sm:$0xf]
    %v89 = vld [vmem:[%s1 + $0x20] sm:$0xf]
    %v90 = vld [vmem:[%s1 + $0x24] sm:$0xf]
    %v91 = vld [vmem:[%s1 + $0x28] sm:$0xf]
    %v92 = vld [vmem:[%s1 + $0x2c] sm:$0xf]
    %v93 = vld [vmem:[%s2 + $0x1] sm:$0x1]
    %v94 = vlaneseq
    %v95 = vshrl.u32 %v94, 7
    %v96 = vsub.s32 0, %v95
    %v97 = vrot.slane %v93, %v96
    %v106 = vunpack.c.l.b16 %v85
    %v107 = vunpack.c.l.b16 %v86
    %v108 = vunpack.c.l.b16 %v87
    %v109 = vunpack.c.l.b16 %v88
    %v110 = vunpack.c.l.b16 %v89
    %v111 = vunpack.c.l.b16 %v90
    %v112 = vunpack.c.l.b16 %v91
    %v113 = vunpack.c.l.b16 %v92
    %v114 = vpack.c.b16 %v107, %v106
    %v115 = vpack.c.b16 %v109, %v108
    %v116 = vpack.c.b16 %v111, %v110
    %v117 = vpack.c.b16 %v113, %v112
    %vm122 = vcmask 523264
    %v124 = vsel %vm122, %v84, 0
    %126 = vmatprep.subr.bf16.mxu0 0
    %127 = vmatpush1.bf16.msra.mxu0 0
    %128 = vmatprep.subr.bf16.mxu0 0
    %129 = vmatpush1.bf16.msra.mxu0 0
    %130 = vmatprep.subr.bf16.mxu0 0
    %131 = vmatpush1.bf16.msra.mxu0 0
    %132 = vmatprep.subr.bf16.mxu0 0
    %133 = vmatpush1.bf16.msra.mxu0 0
    %134 = vmatprep.subr.bf16.mxu0 0
    %135 = vmatpush1.bf16.msra.mxu0 %v117
    %136 = vmatprep.subr.bf16.mxu0 0
    %137 = vmatpush1.bf16.msra.mxu0 %v116
    %138 = vmatprep.subr.bf16.mxu0 0
    %139 = vmatpush1.bf16.msra.mxu0 %v115
    %140 = vmatprep.subr.bf16.mxu0 0
    %141 = vmatpush1.bf16.msra.mxu0 %v114
    %142 = vmatprep.subr.bf16.mxu0 0
    %143 = vmatpush2.bf16.msra.mxu0 0
    %144 = vmatprep.subr.bf16.mxu0 0
    %145 = vmatpush2.bf16.msra.mxu0 0
    %146 = vmatprep.subr.bf16.mxu0 0
    %147 = vmatpush2.bf16.msra.mxu0 0
    %148 = vmatprep.subr.bf16.mxu0 0
    %149 = vmatpush2.bf16.msra.mxu0 0
    %150 = vmatprep.subr.bf16.mxu0 0
    %151 = vmatpush2.bf16.msra.mxu0 0
    %152 = vmatprep.subr.bf16.mxu0 0
    %153 = vmatpush2.bf16.msra.mxu0 0
    %154 = vmatprep.subr.bf16.mxu0 0
    %155 = vmatpush2.bf16.msra.mxu0 0
    %156 = vmatprep.subr.bf16.mxu0 0
    %157 = vmatpush2.bf16.msra.mxu0 0
    %158 = vmatprep.mubr.bf16.mxu0 0
    %159 = vmatmul.mubr.bf16.gmra.mxu0 %v124
    %v160 = vpop.f32.mrf.mxu0
    %v161 = vadd.f32 %v97, %v160
    %v162 = vpop.f32.mrf.mxu0
    %v163 = vpop.f32.mrf.mxu0
    %v164 = vpop.f32.mrf.mxu0
    %165 = vdwg.mxu0
    %v166 = vsel %vm122, %v161, 0.0
    %v167 = vrot.slane %v166, 4
    %v168 = vadd.f32 %v166, %v167
    %v169 = vrot.slane %v168, 2
    %v170 = vadd.f32 %v168, %v169
    %v171 = vrot.slane %v170, 1
    %v172 = vadd.f32 %v170, %v171
    %v173 = vrcp.pop 8.0
    %v174 = vmul.f32 %v172, %v173
    %v175 = vsub.f32 %v161, %v174
    %v176 = vmul.f32 %v175, %v175
    %v177 = vsel %vm122, %v176, 0.0
    %v178 = vrot.slane %v177, 4
    %v179 = vadd.f32 %v177, %v178
    %v180 = vrot.slane %v179, 2
    %v181 = vadd.f32 %v179, %v180
    %v182 = vrot.slane %v181, 1
    %v183 = vadd.f32 %v181, %v182
    %v184 = vmul.f32 %v183, %v173
    %v185 = vld [vmem:[%s2 + $0x5] sm:$0x1]
    %v186 = vadd.f32 %v184, 1e-05
    %v187 = vrsqrt.pop %v186
    %v188 = vmul.f32 %v185, %v187
    %v189 = vld [vmem:[%s2 + $0x9] sm:$0x1]
    %v190 = vmul.f32 %v174, %v188
    %v191 = vsub.f32 %v189, %v190
    %v192 = vlaneseq
    %v193 = vshrl.u32 %v192, 7
    %v194 = vsub.s32 0, %v193
    %v195 = vrot.slane %v188, %v194
    %v196 = vmul.f32 %v161, %v195
    %v197 = vlaneseq
    %v198 = vshrl.u32 %v197, 7
    %v199 = vsub.s32 0, %v198
    %v200 = vrot.slane %v191, %v199
    %v201 = vadd.f32 %v196, %v200
    %v202 = vmax.f32 %v201, 0.0
    %v203 = vpack.c.bf16 %v202, %v202
    %v204 = vld [vmem:[%s1 + $0x30] sm:$0xf]
    %v205 = vld [vmem:[%s1 + $0x34] sm:$0xf]
    %v206 = vld [vmem:[%s1 + $0x38] sm:$0xf]
    %v207 = vld [vmem:[%s1 + $0x3c] sm:$0xf]
    %v208 = vld [vmem:[%s1 + $0x40] sm:$0xf]
    %v209 = vld [vmem:[%s1 + $0x44] sm:$0xf]
    %v210 = vld [vmem:[%s1 + $0x48] sm:$0xf]
    %v211 = vld [vmem:[%s1 + $0x4c] sm:$0xf]
    %v212 = vld [vmem:[%s2 + $0x2] sm:$0x1]
    %v213 = vlaneseq
    %v214 = vshrl.u32 %v213, 7
    %v215 = vsub.s32 0, %v214
    %v216 = vrot.slane %v212, %v215
    %v225 = vunpack.c.l.b16 %v204
    %v226 = vunpack.c.l.b16 %v205
    %v227 = vunpack.c.l.b16 %v206
    %v228 = vunpack.c.l.b16 %v207
    %v229 = vunpack.c.l.b16 %v208
    %v230 = vunpack.c.l.b16 %v209
    %v231 = vunpack.c.l.b16 %v210
    %v232 = vunpack.c.l.b16 %v211
    %v233 = vpack.c.b16 %v226, %v225
    %v234 = vpack.c.b16 %v228, %v227
    %v235 = vpack.c.b16 %v230, %v229
    %v236 = vpack.c.b16 %v232, %v231
    %v242 = vsel %vm122, %v203, 0
    %244 = vmatprep.subr.bf16.mxu0 0
    %245 = vmatpush1.bf16.msra.mxu0 0
    %246 = vmatprep.subr.bf16.mxu0 0
    %247 = vmatpush1.bf16.msra.mxu0 0
    %248 = vmatprep.subr.bf16.mxu0 0
    %249 = vmatpush1.bf16.msra.mxu0 0
    %250 = vmatprep.subr.bf16.mxu0 0
    %251 = vmatpush1.bf16.msra.mxu0 0
    %252 = vmatprep.subr.bf16.mxu0 0
    %253 = vmatpush1.bf16.msra.mxu0 %v236
    %254 = vmatprep.subr.bf16.mxu0 0
    %255 = vmatpush1.bf16.msra.mxu0 %v235
    %256 = vmatprep.subr.bf16.mxu0 0
    %257 = vmatpush1.bf16.msra.mxu0 %v234
    %258 = vmatprep.subr.bf16.mxu0 0
    %259 = vmatpush1.bf16.msra.mxu0 %v233
    %260 = vmatprep.subr.bf16.mxu0 0
    %261 = vmatpush2.bf16.msra.mxu0 0
    %262 = vmatprep.subr.bf16.mxu0 0
    %263 = vmatpush2.bf16.msra.mxu0 0
    %264 = vmatprep.subr.bf16.mxu0 0
    %265 = vmatpush2.bf16.msra.mxu0 0
    %266 = vmatprep.subr.bf16.mxu0 0
    %267 = vmatpush2.bf16.msra.mxu0 0
    %268 = vmatprep.subr.bf16.mxu0 0
    %269 = vmatpush2.bf16.msra.mxu0 0
    %270 = vmatprep.subr.bf16.mxu0 0
    %271 = vmatpush2.bf16.msra.mxu0 0
    %272 = vmatprep.subr.bf16.mxu0 0
    %273 = vmatpush2.bf16.msra.mxu0 0
    %274 = vmatprep.subr.bf16.mxu0 0
    %275 = vmatpush2.bf16.msra.mxu0 0
    %276 = vmatprep.mubr.bf16.mxu0 0
    %277 = vmatmul.mubr.bf16.gmra.mxu0 %v242
    %v278 = vpop.f32.mrf.mxu0
    %v279 = vadd.f32 %v216, %v278
    %v280 = vpop.f32.mrf.mxu0
    %v281 = vpop.f32.mrf.mxu0
    %v282 = vpop.f32.mrf.mxu0
    %283 = vdwg.mxu0
    %v284 = vsel %vm122, %v279, 0.0
    %v285 = vrot.slane %v284, 4
    %v286 = vadd.f32 %v284, %v285
    %v287 = vrot.slane %v286, 2
    %v288 = vadd.f32 %v286, %v287
    %v289 = vrot.slane %v288, 1
    %v290 = vadd.f32 %v288, %v289
    %v291 = vmul.f32 %v290, %v173
    %v292 = vsub.f32 %v279, %v291
    %v293 = vmul.f32 %v292, %v292
    %v294 = vsel %vm122, %v293, 0.0
    %v295 = vrot.slane %v294, 4
    %v296 = vadd.f32 %v294, %v295
    %v297 = vrot.slane %v296, 2
    %v298 = vadd.f32 %v296, %v297
    %v299 = vrot.slane %v298, 1
    %v300 = vadd.f32 %v298, %v299
    %v301 = vmul.f32 %v300, %v173
    %v302 = vld [vmem:[%s2 + $0x6] sm:$0x1]
    %v303 = vadd.f32 %v301, 1e-05
    %v304 = vrsqrt.pop %v303
    %v305 = vmul.f32 %v302, %v304
    %v306 = vld [vmem:[%s2 + $0xa] sm:$0x1]
    %v307 = vmul.f32 %v291, %v305
    %v308 = vsub.f32 %v306, %v307
    %v309 = vlaneseq
    %v310 = vshrl.u32 %v309, 7
    %v311 = vsub.s32 0, %v310
    %v312 = vrot.slane %v305, %v311
    %v313 = vmul.f32 %v279, %v312
    %v314 = vlaneseq
    %v315 = vshrl.u32 %v314, 7
    %v316 = vsub.s32 0, %v315
    %v317 = vrot.slane %v308, %v316
    %v318 = vadd.f32 %v313, %v317
    %v319 = vmax.f32 %v318, 0.0
    %v320 = vpack.c.bf16 %v319, %v319
    %v321 = vld [vmem:[%s1 + $0x50] sm:$0xf]
    %v322 = vld [vmem:[%s1 + $0x54] sm:$0xf]
    %v323 = vld [vmem:[%s1 + $0x58] sm:$0xf]
    %v324 = vld [vmem:[%s1 + $0x5c] sm:$0xf]
    %v325 = vld [vmem:[%s1 + $0x60] sm:$0xf]
    %v326 = vld [vmem:[%s1 + $0x64] sm:$0xf]
    %v327 = vld [vmem:[%s1 + $0x68] sm:$0xf]
    %v328 = vld [vmem:[%s1 + $0x6c] sm:$0xf]
    %v329 = vld [vmem:[%s2 + $0x3] sm:$0x1]
    %v330 = vlaneseq
    %v331 = vshrl.u32 %v330, 7
    %v332 = vsub.s32 0, %v331
    %v333 = vrot.slane %v329, %v332
    %v342 = vunpack.c.l.b16 %v321
    %v343 = vunpack.c.l.b16 %v322
    %v344 = vunpack.c.l.b16 %v323
    %v345 = vunpack.c.l.b16 %v324
    %v346 = vunpack.c.l.b16 %v325
    %v347 = vunpack.c.l.b16 %v326
    %v348 = vunpack.c.l.b16 %v327
    %v349 = vunpack.c.l.b16 %v328
    %v350 = vpack.c.b16 %v343, %v342
    %v351 = vpack.c.b16 %v345, %v344
    %v352 = vpack.c.b16 %v347, %v346
    %v353 = vpack.c.b16 %v349, %v348
    %v359 = vsel %vm122, %v320, 0
    %361 = vmatprep.subr.bf16.mxu0 0
    %362 = vmatpush1.bf16.msra.mxu0 0
    %363 = vmatprep.subr.bf16.mxu0 0
    %364 = vmatpush1.bf16.msra.mxu0 0
    %365 = vmatprep.subr.bf16.mxu0 0
    %366 = vmatpush1.bf16.msra.mxu0 0
    %367 = vmatprep.subr.bf16.mxu0 0
    %368 = vmatpush1.bf16.msra.mxu0 0
    %369 = vmatprep.subr.bf16.mxu0 0
    %370 = vmatpush1.bf16.msra.mxu0 %v353
    %371 = vmatprep.subr.bf16.mxu0 0
    %372 = vmatpush1.bf16.msra.mxu0 %v352
    %373 = vmatprep.subr.bf16.mxu0 0
    %374 = vmatpush1.bf16.msra.mxu0 %v351
    %375 = vmatprep.subr.bf16.mxu0 0
    %376 = vmatpush1.bf16.msra.mxu0 %v350
    %377 = vmatprep.subr.bf16.mxu0 0
    %378 = vmatpush2.bf16.msra.mxu0 0
    %379 = vmatprep.subr.bf16.mxu0 0
    %380 = vmatpush2.bf16.msra.mxu0 0
    %381 = vmatprep.subr.bf16.mxu0 0
    %382 = vmatpush2.bf16.msra.mxu0 0
    %383 = vmatprep.subr.bf16.mxu0 0
    %384 = vmatpush2.bf16.msra.mxu0 0
    %385 = vmatprep.subr.bf16.mxu0 0
    %386 = vmatpush2.bf16.msra.mxu0 0
    %387 = vmatprep.subr.bf16.mxu0 0
    %388 = vmatpush2.bf16.msra.mxu0 0
    %389 = vmatprep.subr.bf16.mxu0 0
    %390 = vmatpush2.bf16.msra.mxu0 0
    %391 = vmatprep.subr.bf16.mxu0 0
    %392 = vmatpush2.bf16.msra.mxu0 0
    %393 = vmatprep.mubr.bf16.mxu0 0
    %394 = vmatmul.mubr.bf16.gmra.mxu0 %v359
    %v395 = vpop.f32.mrf.mxu0
    %v396 = vadd.f32 %v333, %v395
    %v397 = vpop.f32.mrf.mxu0
    %v398 = vpop.f32.mrf.mxu0
    %v399 = vpop.f32.mrf.mxu0
    %400 = vdwg.mxu0
    %v401 = vsel %vm122, %v396, 0.0
    %v402 = vrot.slane %v401, 4
    %v403 = vadd.f32 %v401, %v402
    %v404 = vrot.slane %v403, 2
    %v405 = vadd.f32 %v403, %v404
    %v406 = vrot.slane %v405, 1
    %v407 = vadd.f32 %v405, %v406
    %v408 = vmul.f32 %v407, %v173
    %v409 = vsub.f32 %v396, %v408
    %v410 = vmul.f32 %v409, %v409
    %v411 = vsel %vm122, %v410, 0.0
    %v412 = vrot.slane %v411, 4
    %v413 = vadd.f32 %v411, %v412
    %v414 = vrot.slane %v413, 2
    %v415 = vadd.f32 %v413, %v414
    %v416 = vrot.slane %v415, 1
    %v417 = vadd.f32 %v415, %v416
    %v418 = vmul.f32 %v417, %v173
    %v419 = vld [vmem:[%s2 + $0x7] sm:$0x1]
    %v420 = vadd.f32 %v418, 1e-05
    %v421 = vrsqrt.pop %v420
    %v422 = vmul.f32 %v419, %v421
    %v423 = vld [vmem:[%s2 + $0xb] sm:$0x1]
    %v424 = vmul.f32 %v408, %v422
    %v425 = vsub.f32 %v423, %v424
    %v426 = vlaneseq
    %v427 = vshrl.u32 %v426, 7
    %v428 = vsub.s32 0, %v427
    %v429 = vrot.slane %v422, %v428
    %v430 = vmul.f32 %v396, %v429
    %v431 = vlaneseq
    %v432 = vshrl.u32 %v431, 7
    %v433 = vsub.s32 0, %v432
    %v434 = vrot.slane %v425, %v433
    %v435 = vadd.f32 %v430, %v434
    %v436 = vmax.f32 %v435, 0.0
    %v437 = vpack.c.bf16 %v436, %v436
    %v438 = vld [vmem:[%s1 + $0x70] sm:$0xf]
    %v439 = vld [vmem:[%s1 + $0x74] sm:$0xf]
    %v440 = vld [vmem:[%s1 + $0x78] sm:$0xf]
    %v441 = vld [vmem:[%s1 + $0x7c] sm:$0xf]
    %v442 = vld [vmem:[%s1 + $0x80] sm:$0xf]
    %v443 = vld [vmem:[%s1 + $0x84] sm:$0xf]
    %v444 = vld [vmem:[%s1 + $0x88] sm:$0xf]
    %v445 = vld [vmem:[%s1 + $0x8c] sm:$0xf]
    %v446 = vld [vmem:[%s2 + $0x4] sm:$0x1]
    %v447 = vlaneseq
    %v448 = vshrl.u32 %v447, 7
    %v449 = vsub.s32 0, %v448
    %v450 = vrot.slane %v446, %v449
    %v459 = vunpack.c.l.b16 %v438
    %v460 = vunpack.c.l.b16 %v439
    %v461 = vunpack.c.l.b16 %v440
    %v462 = vunpack.c.l.b16 %v441
    %v463 = vunpack.c.l.b16 %v442
    %v464 = vunpack.c.l.b16 %v443
    %v465 = vunpack.c.l.b16 %v444
    %v466 = vunpack.c.l.b16 %v445
    %v467 = vpack.c.b16 %v460, %v459
    %v468 = vpack.c.b16 %v462, %v461
    %v469 = vpack.c.b16 %v464, %v463
    %v470 = vpack.c.b16 %v466, %v465
    %v476 = vsel %vm122, %v437, 0
    %478 = vmatprep.subr.bf16.mxu0 0
    %479 = vmatpush1.bf16.msra.mxu0 0
    %480 = vmatprep.subr.bf16.mxu0 0
    %481 = vmatpush1.bf16.msra.mxu0 0
    %482 = vmatprep.subr.bf16.mxu0 0
    %483 = vmatpush1.bf16.msra.mxu0 0
    %484 = vmatprep.subr.bf16.mxu0 0
    %485 = vmatpush1.bf16.msra.mxu0 0
    %486 = vmatprep.subr.bf16.mxu0 0
    %487 = vmatpush1.bf16.msra.mxu0 %v470
    %488 = vmatprep.subr.bf16.mxu0 0
    %489 = vmatpush1.bf16.msra.mxu0 %v469
    %490 = vmatprep.subr.bf16.mxu0 0
    %491 = vmatpush1.bf16.msra.mxu0 %v468
    %492 = vmatprep.subr.bf16.mxu0 0
    %493 = vmatpush1.bf16.msra.mxu0 %v467
    %494 = vmatprep.subr.bf16.mxu0 0
    %495 = vmatpush2.bf16.msra.mxu0 0
    %496 = vmatprep.subr.bf16.mxu0 0
    %497 = vmatpush2.bf16.msra.mxu0 0
    %498 = vmatprep.subr.bf16.mxu0 0
    %499 = vmatpush2.bf16.msra.mxu0 0
    %500 = vmatprep.subr.bf16.mxu0 0
    %501 = vmatpush2.bf16.msra.mxu0 0
    %502 = vmatprep.subr.bf16.mxu0 0
    %503 = vmatpush2.bf16.msra.mxu0 0
    %504 = vmatprep.subr.bf16.mxu0 0
    %505 = vmatpush2.bf16.msra.mxu0 0
    %506 = vmatprep.subr.bf16.mxu0 0
    %507 = vmatpush2.bf16.msra.mxu0 0
    %508 = vmatprep.subr.bf16.mxu0 0
    %509 = vmatpush2.bf16.msra.mxu0 0
    %510 = vmatprep.mubr.bf16.mxu0 0
    %511 = vmatmul.mubr.bf16.gmra.mxu0 %v476
    %v512 = vpop.f32.mrf.mxu0
    %v513 = vadd.f32 %v450, %v512
    %v514 = vpop.f32.mrf.mxu0
    %v515 = vpop.f32.mrf.mxu0
    %v516 = vpop.f32.mrf.mxu0
    %517 = vdwg.mxu0
    %v518 = vsel %vm122, %v513, 0.0
    %v519 = vrot.slane %v518, 4
    %v520 = vadd.f32 %v518, %v519
    %v521 = vrot.slane %v520, 2
    %v522 = vadd.f32 %v520, %v521
    %v523 = vrot.slane %v522, 1
    %v524 = vadd.f32 %v522, %v523
    %v525 = vmul.f32 %v524, %v173
    %v526 = vsub.f32 %v513, %v525
    %v527 = vmul.f32 %v526, %v526
    %v528 = vsel %vm122, %v527, 0.0
    %v529 = vrot.slane %v528, 4
    %v530 = vadd.f32 %v528, %v529
    %v531 = vrot.slane %v530, 2
    %v532 = vadd.f32 %v530, %v531
    %v533 = vrot.slane %v532, 1
    %v534 = vadd.f32 %v532, %v533
    %v535 = vmul.f32 %v534, %v173
    %v536 = vld [vmem:[%s2 + $0x8] sm:$0x1]
    %v537 = vadd.f32 %v535, 1e-05
    %v538 = vrsqrt.pop %v537
    %v539 = vmul.f32 %v536, %v538
    %v540 = vld [vmem:[%s2 + $0xc] sm:$0x1]
    %v541 = vmul.f32 %v525, %v539
    %v542 = vsub.f32 %v540, %v541
    %v543 = vlaneseq
    %v544 = vshrl.u32 %v543, 7
    %v545 = vsub.s32 0, %v544
    %v546 = vrot.slane %v539, %v545
    %v547 = vmul.f32 %v513, %v546
    %v548 = vlaneseq
    %v549 = vshrl.u32 %v548, 7
    %v550 = vsub.s32 0, %v549
    %v551 = vrot.slane %v542, %v550
    %v552 = vadd.f32 %v547, %v551
    %v553 = vmax.f32 %v552, 0.0
    %v554 = vpack.c.bf16 %v553, %v553
    %v555 = vld [vmem:[%s1 + $0x90] sm:$0xf]
    %v556 = vld [vmem:[%s1 + $0x94] sm:$0xf]
    %v557 = vld [vmem:[%s1 + $0x98] sm:$0xf]
    %v558 = vld [vmem:[%s1 + $0x9c] sm:$0xf]
    %v559 = vld [vmem:[%s1 + $0xa0] sm:$0xf]
    %v560 = vld [vmem:[%s1 + $0xa4] sm:$0xf]
    %v561 = vld [vmem:[%s1 + $0xa8] sm:$0xf]
    %v562 = vld [vmem:[%s1 + $0xac] sm:$0xf]
    %v571 = vunpack.c.l.b16 %v555
    %v572 = vunpack.c.l.b16 %v556
    %v573 = vunpack.c.l.b16 %v557
    %v574 = vunpack.c.l.b16 %v558
    %v575 = vunpack.c.l.b16 %v559
    %v576 = vunpack.c.l.b16 %v560
    %v577 = vunpack.c.l.b16 %v561
    %v578 = vunpack.c.l.b16 %v562
    %v579 = vpack.c.b16 %v572, %v571
    %v580 = vpack.c.b16 %v574, %v573
    %v581 = vpack.c.b16 %v576, %v575
    %v582 = vpack.c.b16 %v578, %v577
    %v588 = vsel %vm122, %v554, 0
    %590 = vmatprep.subr.bf16.mxu0 0
    %591 = vmatpush1.bf16.msra.mxu0 0
    %592 = vmatprep.subr.bf16.mxu0 0
    %593 = vmatpush1.bf16.msra.mxu0 0
    %594 = vmatprep.subr.bf16.mxu0 0
    %595 = vmatpush1.bf16.msra.mxu0 0
    %596 = vmatprep.subr.bf16.mxu0 0
    %597 = vmatpush1.bf16.msra.mxu0 0
    %598 = vmatprep.subr.bf16.mxu0 0
    %599 = vmatpush1.bf16.msra.mxu0 %v582
    %600 = vmatprep.subr.bf16.mxu0 0
    %601 = vmatpush1.bf16.msra.mxu0 %v581
    %602 = vmatprep.subr.bf16.mxu0 0
    %603 = vmatpush1.bf16.msra.mxu0 %v580
    %604 = vmatprep.subr.bf16.mxu0 0
    %605 = vmatpush1.bf16.msra.mxu0 %v579
    %606 = vmatprep.subr.bf16.mxu0 0
    %607 = vmatpush2.bf16.msra.mxu0 0
    %608 = vmatprep.subr.bf16.mxu0 0
    %609 = vmatpush2.bf16.msra.mxu0 0
    %610 = vmatprep.subr.bf16.mxu0 0
    %611 = vmatpush2.bf16.msra.mxu0 0
    %612 = vmatprep.subr.bf16.mxu0 0
    %613 = vmatpush2.bf16.msra.mxu0 0
    %614 = vmatprep.subr.bf16.mxu0 0
    %615 = vmatpush2.bf16.msra.mxu0 0
    %616 = vmatprep.subr.bf16.mxu0 0
    %617 = vmatpush2.bf16.msra.mxu0 0
    %618 = vmatprep.subr.bf16.mxu0 0
    %619 = vmatpush2.bf16.msra.mxu0 0
    %620 = vmatprep.subr.bf16.mxu0 0
    %621 = vmatpush2.bf16.msra.mxu0 0
    %622 = vmatprep.mubr.bf16.mxu0 0
    %623 = vmatmul.mubr.bf16.gmra.mxu0 %v588
    %v624 = vpop.f32.mrf.mxu0
    %v625 = vadd.f32 0.0, %v624
    %v626 = vpop.f32.mrf.mxu0
    %v627 = vpop.f32.mrf.mxu0
    %v628 = vpop.f32.mrf.mxu0
    %629 = vdwg.mxu0
    %v630 = vld [vmem:[%s2 + $0xd] sm:$0x1]
    %v631 = vlaneseq
    %v632 = vshrl.u32 %v631, 7
    %v633 = vsub.s32 0, %v632
    %v634 = vrot.slane %v630, %v633
    %v635 = vadd.f32 %v625, %v634
    %vm636 = vcmask 130048
    %637 = vst.msk [vmem:[#allocation2] sm:$0xff] %vm636, %v635
    // Predicated region
    $region14: #{tpu_custom_call.1} parent=1 // pred_check
      _
    $region15: #{tpu_custom_call.1} parent=1 // pred_check_branch
      %639 = sbr.rel (0) target = $region17
    $region16: #{tpu_custom_call.1} parent=1 // pred_region
      %s641 = ssub.s32 128, 128
      %642 = vsyncadd [#allocation3], %s641
      %s644 = sshll.u32 [#allocation2], 4
      %s645 = int_to_ptr.vmem [resolvable:$true] %s644
      %647 = dma.vmem_to_hbm [thread:$0]  %s645, 128, %s3, [#allocation3]
    $region17: #{tpu_custom_call.1} parent=1 // pred_fallthru
      _
    // Predicated region
    $region18: #{tpu_custom_call.1} parent=1 // pred_check
      _
    $region19: #{tpu_custom_call.1} parent=1 // pred_check_branch
      %649 = sbr.rel (0) target = $region21
    $region20: #{tpu_custom_call.1} parent=1 // pred_region
      %650 = dma.done [#allocation3], 128
    $region21: #{tpu_custom_call.1} parent=1 // pred_fallthru
      _
    %651 = vsyncpa [#allocation3], 1

</llo_original>
